<compile_context>
chip_gen: v7x
topology: tpu7x:2x2x1
jax: 0.10.0
libtpu: 0.0.40
codegen_flags: <defaults>
</compile_context>

<pallas_src>
import functools

import jax
import jax.numpy as jnp
from jax.experimental import pallas as pl
from jax.experimental.pallas import tpu as pltpu


def conv1x1_relu_kernel(x_ref, w_ref, b_ref, o_ref):
    # x_ref: (TM, Cin_pad) f32, w_ref: (Cin_pad, Cout) bf16,
    # b_ref: (1, Cout) f32,    o_ref: (TM, Cout) f32.
    x = x_ref[...].astype(w_ref.dtype)  # single-vreg cast; MXU eats bf16 natively
    acc = jnp.dot(x, w_ref[...], preferred_element_type=jnp.float32)  # f32 accumulate
    o_ref[...] = jnp.maximum(acc + b_ref[...], 0.0)  # bias + ReLU in f32


def prepare_weight(weight_oi, *, lane=128, dtype=jnp.bfloat16):
    """One-time parameter prep: [Cout, Cin] f32 -> [Cin_pad, Cout] bf16.

    Transposing here (not per call) guarantees the MXU consumes the weight in
    its native orientation; zero-padding Cin to a lane multiple makes the
    dominant weight DMA fully unmasked. Zero rows contribute nothing to the
    contraction, so results are unchanged.
    """
    cout, cin = weight_oi.shape
    cin_pad = ((cin + lane - 1) // lane) * lane
    w_io = jnp.transpose(weight_oi, (1, 0))  # [Cin, Cout]
    if cin_pad != cin:
        w_io = jnp.pad(w_io, ((0, cin_pad - cin), (0, 0)))
    return w_io.astype(dtype)


def conv2d_1x1_relu(x_nchw, w_io_pad, bias_o, cin, *, tm=512):
    """1x1 Conv2d + ReLU.

    x_nchw:   [N, Cin, H, W] float32
    w_io_pad: [Cin_pad, Cout] (output of prepare_weight; bf16)
    bias_o:   [Cout] float32
    cin:      logical (unpadded) Cin of the conv.
    """
    n, cin_x, h, w = x_nchw.shape
    assert cin_x == cin
    cin_pad, cout = w_io_pad.shape
    m = n * h * w

    if h == 1 and w == 1:
        # H = W = 1: NCHW flattening is a pure reshape (no copy, no transpose).
        x2d = x_nchw.reshape(m, cin)
    else:
        x2d = jnp.transpose(x_nchw, (0, 2, 3, 1)).reshape(m, cin)

    if cin_pad != cin:
        # Zero-pad the contraction dim to match the pre-padded weight.
        x2d = jnp.pad(x2d, ((0, 0), (0, cin_pad - cin)))
    b2d = bias_o.reshape(1, cout).astype(jnp.float32)

    def cost(rows):
        return pl.CostEstimate(
            flops=2 * rows * cin_pad * cout,
            transcendentals=0,
            bytes_accessed=(
                rows * cin_pad * 4
                + w_io_pad.size * w_io_pad.dtype.itemsize
                + b2d.size * 4
                + rows * cout * 4
            ),
        )

    if m <= tm:
        # Single full-block call, grid=() -- the right structure for tiny M:
        # fixed DMA bytes, negligible compute, no per-step overhead to add.
        out2d = pl.pallas_call(
            conv1x1_relu_kernel,
            out_shape=jax.ShapeDtypeStruct((m, cout), jnp.float32),
            in_specs=[
                pl.BlockSpec((m, cin_pad), lambda: (0, 0),
                             memory_space=pltpu.MemorySpace.VMEM),
                pl.BlockSpec((cin_pad, cout), lambda: (0, 0),
                             memory_space=pltpu.MemorySpace.VMEM),
                pl.BlockSpec((1, cout), lambda: (0, 0),
                             memory_space=pltpu.MemorySpace.VMEM),
            ],
            out_specs=pl.BlockSpec((m, cout), lambda: (0, 0),
                                   memory_space=pltpu.MemorySpace.VMEM),
            cost_estimate=cost(m),
        )(x2d, w_io_pad, b2d)
    else:
        # Generic H*W > 1 path: tile M with (8,128)-aligned blocks so large
        # spatial inputs never stage an over-VMEM block. Weight/bias blocks are
        # grid-invariant (index_map returns (0,0)) so they stay resident.
        m_pad = ((m + tm - 1) // tm) * tm
        if m_pad != m:
            x2d = jnp.pad(x2d, ((0, m_pad - m), (0, 0)))
        out2d = pl.pallas_call(
            conv1x1_relu_kernel,
            out_shape=jax.ShapeDtypeStruct((m_pad, cout), jnp.float32),
            grid=(m_pad // tm,),
            in_specs=[
                pl.BlockSpec((tm, cin_pad), lambda i: (i, 0),
                             memory_space=pltpu.MemorySpace.VMEM),
                pl.BlockSpec((cin_pad, cout), lambda i: (0, 0),
                             memory_space=pltpu.MemorySpace.VMEM),
                pl.BlockSpec((1, cout), lambda i: (0, 0),
                             memory_space=pltpu.MemorySpace.VMEM),
            ],
            out_specs=pl.BlockSpec((tm, cout), lambda i: (i, 0),
                                   memory_space=pltpu.MemorySpace.VMEM),
            compiler_params=pltpu.CompilerParams(
                dimension_semantics=("parallel",)),
            cost_estimate=cost(m_pad),
        )(x2d, w_io_pad, b2d)
        out2d = out2d[:m]

    if h == 1 and w == 1:
        return out2d.reshape(n, cout, 1, 1)
    return out2d.reshape(n, h, w, cout).transpose(0, 3, 1, 2)


if __name__ == "__main__":
    # Shapes from the module: Conv2d(960, 240, kernel_size=1), input [1, 960, 1, 1].
    N, CIN, COUT, H, W = 1, 960, 240, 1, 1

    key = jax.random.PRNGKey(0)
    kx, kw, kb = jax.random.split(key, 3)

    x = jax.random.normal(kx, (N, CIN, H, W), dtype=jnp.float32)
    weight_f32 = jax.random.normal(kw, (COUT, CIN), dtype=jnp.float32) * 0.02
    bias = jax.random.normal(kb, (COUT,), dtype=jnp.float32) * 0.02

    # One-time parameter prep: transpose to [Cin, Cout], pad Cin 960->1024,
    # cast to bf16 (safe drop-in on v5e / v6e / v7x).
    weight_prepped = prepare_weight(weight_f32)  # [1024, 240] bf16

    run = jax.jit(functools.partial(conv2d_1x1_relu, cin=CIN))
    y = jax.block_until_ready(run(x, weight_prepped, bias))
    assert y.shape == (N, COUT, H, W), y.shape

    # Tight check against a reference that uses the same bf16-rounded operands.
    xq = x.reshape(N, CIN).astype(jnp.bfloat16).astype(jnp.float32)
    wq = weight_prepped[:CIN].astype(jnp.float32)  # [Cin, Cout]
    ref = jnp.maximum(xq @ wq + bias, 0.0).reshape(N, COUT, 1, 1)
    assert jnp.allclose(y, ref, atol=1e-3, rtol=1e-3), float(jnp.max(jnp.abs(y - ref)))

    # Looser sanity check against the full-f32 math of the original module.
    ref_f32 = jnp.maximum(
        x.reshape(N, CIN) @ weight_f32.T + bias, 0.0
    ).reshape(N, COUT, 1, 1)
    assert jnp.allclose(y, ref_f32, atol=5e-2, rtol=5e-2)

    print("KERNEL_OK")
</pallas_src>

<mosaic_0001>
module attributes {stable_mosaic.version = 11 : i64} {
  func.func @conv1x1_relu_kernel(%arg0: memref<1x1024xf32, #tpu.memory_space<vmem>>, %arg1: memref<1024x240xbf16, #tpu.memory_space<vmem>>, %arg2: memref<1x240xf32, #tpu.memory_space<vmem>>, %arg3: memref<1x240xf32, #tpu.memory_space<vmem>>) attributes {dimension_semantics = [], scalar_prefetch = 0 : i64, scratch_operands = 0 : i64, tpu.core_type = #tpu.core_type<tc>} {
    %c0 = arith.constant 0 : index
    %c0_0 = arith.constant 0 : index
    %0 = vector.load %arg0[%c0, %c0_0] : memref<1x1024xf32, #tpu.memory_space<vmem>>, vector<1x1024xf32>
    %1 = arith.truncf %0 : vector<1x1024xf32> to vector<1x1024xbf16>
    %c0_1 = arith.constant 0 : index
    %c0_2 = arith.constant 0 : index
    %2 = vector.load %arg1[%c0_1, %c0_2] : memref<1024x240xbf16, #tpu.memory_space<vmem>>, vector<1024x240xbf16>
    %cst = arith.constant dense<0.000000e+00> : vector<1x240xf32>
    %3 = tpu.matmul %1, %2, %cst {dimension_numbers = #tpu.dot_dimension_numbers<[1], [0], [0], [1], [0, 0, 1, 1], [], []>} : vector<1x1024xbf16>, vector<1024x240xbf16>, vector<1x240xf32> -> vector<1x240xf32>
    %c0_3 = arith.constant 0 : index
    %c0_4 = arith.constant 0 : index
    %4 = vector.load %arg2[%c0_3, %c0_4] : memref<1x240xf32, #tpu.memory_space<vmem>>, vector<1x240xf32>
    %5 = arith.addf %3, %4 : vector<1x240xf32>
    %cst_5 = arith.constant 0.000000e+00 : f32
    %6 = vector.broadcast %cst_5 : f32 to vector<1x240xf32>
    %7 = arith.maximumf %5, %6 : vector<1x240xf32>
    %c0_6 = arith.constant 0 : index
    %c0_7 = arith.constant 0 : index
    %8 = vector.load %arg3[%c0_6, %c0_7] : memref<1x240xf32, #tpu.memory_space<vmem>>, vector<1x240xf32>
    tpu.vector_store %arg3[%c0_6, %c0_7], %7 {strides = array<i32>} : memref<1x240xf32, #tpu.memory_space<vmem>>, vector<1x240xf32>,
    return
  }
}

</mosaic_0001>

<llo_original>
// kernel: conv2d_1x1_relu.1
$region0: #{conv2d_1x1_relu.1}
  #allocation0 [shape = 'u32[]', space=smem, size = 0x4, offset = 0x4, fixed_abs, tag = 'smem constant byte address 0x4 - core index']
  #allocation1 [shape = 'u32[144,128]{1,0:T(1,128)}', space=vmem, size = 0x12000, scoped, tag = 'internal scratch']
  %s0 = inlined_call_operand.vmem [shape: f32[1,1024], index: 0, kind: input, shape index: {}]
  %s1 = inlined_call_operand.vmem [shape: bf16[1024,240], index: 1, kind: input, shape index: {}]
  %s2 = inlined_call_operand.vmem [shape: f32[1,240], index: 2, kind: input, shape index: {}]
  %s3 = inlined_call_operand.hbm [shape: f32[1,240], index: 3, kind: output, shape index: {}]
  %s4 = sld [smem:[#allocation0]]
  $region22: #{conv2d_1x1_relu.1} parent=0
    _
  %s6 = ssub.s32 1, %s4
  %s7 = scalar_select 0, %s6, %s4
  $region1: #{conv2d_1x1_relu.1} parent=0
    #allocation2 [shape = 'u8[1024]{0}', space=vmem, size = 0x400, scoped, tag = 'output window, operand 0, single buffered']
    #allocation3 [shape = 's32[1]{0}', space=sflag, size = 0x4, scoped, tag = 'scoped memory for conv2d_1x1_relu.1']
    %8 = vsyncpa [#allocation3], 0
    // Predicated region
    $region2: #{conv2d_1x1_relu.1} parent=1 // pred_check
      _
    $region3: #{conv2d_1x1_relu.1} parent=1 // pred_check_branch
      %10 = sbr.rel (0) target = $region5
    $region4: #{conv2d_1x1_relu.1} parent=1 // pred_region
      _
    $region5: #{conv2d_1x1_relu.1} parent=1 // pred_fallthru
      _
    // Predicated region
    $region6: #{conv2d_1x1_relu.1} parent=1 // pred_check
      _
    $region7: #{conv2d_1x1_relu.1} parent=1 // pred_check_branch
      %12 = sbr.rel (0) target = $region9
    $region8: #{conv2d_1x1_relu.1} parent=1 // pred_region
      _
    $region9: #{conv2d_1x1_relu.1} parent=1 // pred_fallthru
      _
    // Predicated region
    $region10: #{conv2d_1x1_relu.1} parent=1 // pred_check
      _
    $region11: #{conv2d_1x1_relu.1} parent=1 // pred_check_branch
      %14 = sbr.rel (0) target = $region13
    $region12: #{conv2d_1x1_relu.1} parent=1 // pred_region
      _
    $region13: #{conv2d_1x1_relu.1} parent=1 // pred_fallthru
      _
    %v15 = vld [vmem:[%s0] sm:$0xff]
    %v17 = vlaneseq
    %v18 = vshrl.u32 %v17, 7
    %v19 = vsub.s32 0, %v18
    %v20 = vrot.slane %v15, %v19
    %v21 = vlaneseq
    %v22 = vshrl.u32 %v21, 7
    %v23 = vsub.s32 1, %v22
    %v24 = vrot.slane %v15, %v23
    %v25 = vlaneseq
    %v26 = vshrl.u32 %v25, 7
    %v27 = vsub.s32 2, %v26
    %v28 = vrot.slane %v15, %v27
    %v29 = vlaneseq
    %v30 = vshrl.u32 %v29, 7
    %v31 = vsub.s32 3, %v30
    %v32 = vrot.slane %v15, %v31
    %v33 = vlaneseq
    %v34 = vshrl.u32 %v33, 7
    %v35 = vsub.s32 4, %v34
    %v36 = vrot.slane %v15, %v35
    %v37 = vlaneseq
    %v38 = vshrl.u32 %v37, 7
    %v39 = vsub.s32 5, %v38
    %v40 = vrot.slane %v15, %v39
    %v41 = vlaneseq
    %v42 = vshrl.u32 %v41, 7
    %v43 = vsub.s32 6, %v42
    %v44 = vrot.slane %v15, %v43
    %v45 = vlaneseq
    %v46 = vshrl.u32 %v45, 7
    %v47 = vsub.s32 7, %v46
    %v48 = vrot.slane %v15, %v47
    %v57 = vpack.c.bf16 %v20, %v20
    %v58 = vpack.c.bf16 %v24, %v24
    %v59 = vpack.c.bf16 %v28, %v28
    %v60 = vpack.c.bf16 %v32, %v32
    %v61 = vpack.c.bf16 %v36, %v36
    %v62 = vpack.c.bf16 %v40, %v40
    %v63 = vpack.c.bf16 %v44, %v44
    %v64 = vpack.c.bf16 %v48, %v48
    %v65 = vld [vmem:[%s1] sm:$0xff]
    %v66 = vld [vmem:[%s1 + $0x8] sm:$0xff]
    %v67 = vld [vmem:[%s1 + $0x10] sm:$0xff]
    %v68 = vld [vmem:[%s1 + $0x18] sm:$0xff]
    %v69 = vld [vmem:[%s1 + $0x20] sm:$0xff]
    %v70 = vld [vmem:[%s1 + $0x28] sm:$0xff]
    %v71 = vld [vmem:[%s1 + $0x30] sm:$0xff]
    %v72 = vld [vmem:[%s1 + $0x38] sm:$0xff]
    %v73 = vld [vmem:[%s1 + $0x40] sm:$0xff]
    %v74 = vld [vmem:[%s1 + $0x48] sm:$0xff]
    %v75 = vld [vmem:[%s1 + $0x50] sm:$0xff]
    %v76 = vld [vmem:[%s1 + $0x58] sm:$0xff]
    %v77 = vld [vmem:[%s1 + $0x60] sm:$0xff]
    %v78 = vld [vmem:[%s1 + $0x68] sm:$0xff]
    %v79 = vld [vmem:[%s1 + $0x70] sm:$0xff]
    %v80 = vld [vmem:[%s1 + $0x78] sm:$0xff]
    %v81 = vld [vmem:[%s1 + $0x80] sm:$0xff]
    %v82 = vld [vmem:[%s1 + $0x88] sm:$0xff]
    %v83 = vld [vmem:[%s1 + $0x90] sm:$0xff]
    %v84 = vld [vmem:[%s1 + $0x98] sm:$0xff]
    %v85 = vld [vmem:[%s1 + $0xa0] sm:$0xff]
    %v86 = vld [vmem:[%s1 + $0xa8] sm:$0xff]
    %v87 = vld [vmem:[%s1 + $0xb0] sm:$0xff]
    %v88 = vld [vmem:[%s1 + $0xb8] sm:$0xff]
    %v89 = vld [vmem:[%s1 + $0xc0] sm:$0xff]
    %v90 = vld [vmem:[%s1 + $0xc8] sm:$0xff]
    %v91 = vld [vmem:[%s1 + $0xd0] sm:$0xff]
    %v92 = vld [vmem:[%s1 + $0xd8] sm:$0xff]
    %v93 = vld [vmem:[%s1 + $0xe0] sm:$0xff]
    %v94 = vld [vmem:[%s1 + $0xe8] sm:$0xff]
    %v95 = vld [vmem:[%s1 + $0xf0] sm:$0xff]
    %v96 = vld [vmem:[%s1 + $0xf8] sm:$0xff]
    %v97 = vld [vmem:[%s1 + $0x100] sm:$0xff]
    %v98 = vld [vmem:[%s1 + $0x108] sm:$0xff]
    %v99 = vld [vmem:[%s1 + $0x110] sm:$0xff]
    %v100 = vld [vmem:[%s1 + $0x118] sm:$0xff]
    %v101 = vld [vmem:[%s1 + $0x120] sm:$0xff]
    %v102 = vld [vmem:[%s1 + $0x128] sm:$0xff]
    %v103 = vld [vmem:[%s1 + $0x130] sm:$0xff]
    %v104 = vld [vmem:[%s1 + $0x138] sm:$0xff]
    %v105 = vld [vmem:[%s1 + $0x140] sm:$0xff]
    %v106 = vld [vmem:[%s1 + $0x148] sm:$0xff]
    %v107 = vld [vmem:[%s1 + $0x150] sm:$0xff]
    %v108 = vld [vmem:[%s1 + $0x158] sm:$0xff]
    %v109 = vld [vmem:[%s1 + $0x160] sm:$0xff]
    %v110 = vld [vmem:[%s1 + $0x168] sm:$0xff]
    %v111 = vld [vmem:[%s1 + $0x170] sm:$0xff]
    %v112 = vld [vmem:[%s1 + $0x178] sm:$0xff]
    %v113 = vld [vmem:[%s1 + $0x180] sm:$0xff]
    %v114 = vld [vmem:[%s1 + $0x188] sm:$0xff]
    %v115 = vld [vmem:[%s1 + $0x190] sm:$0xff]
    %v116 = vld [vmem:[%s1 + $0x198] sm:$0xff]
    %v117 = vld [vmem:[%s1 + $0x1a0] sm:$0xff]
    %v118 = vld [vmem:[%s1 + $0x1a8] sm:$0xff]
    %v119 = vld [vmem:[%s1 + $0x1b0] sm:$0xff]
    %v120 = vld [vmem:[%s1 + $0x1b8] sm:$0xff]
    %v121 = vld [vmem:[%s1 + $0x1c0] sm:$0xff]
    %v122 = vld [vmem:[%s1 + $0x1c8] sm:$0xff]
    %v123 = vld [vmem:[%s1 + $0x1d0] sm:$0xff]
    %v124 = vld [vmem:[%s1 + $0x1d8] sm:$0xff]
    %v125 = vld [vmem:[%s1 + $0x1e0] sm:$0xff]
    %v126 = vld [vmem:[%s1 + $0x1e8] sm:$0xff]
    %v127 = vld [vmem:[%s1 + $0x1f0] sm:$0xff]
    %v128 = vld [vmem:[%s1 + $0x1f8] sm:$0xff]
    %v129 = vld [vmem:[%s1 + $0x200] sm:$0xff]
    %v130 = vld [vmem:[%s1 + $0x208] sm:$0xff]
    %v131 = vld [vmem:[%s1 + $0x210] sm:$0xff]
    %v132 = vld [vmem:[%s1 + $0x218] sm:$0xff]
    %v133 = vld [vmem:[%s1 + $0x220] sm:$0xff]
    %v134 = vld [vmem:[%s1 + $0x228] sm:$0xff]
    %v135 = vld [vmem:[%s1 + $0x230] sm:$0xff]
    %v136 = vld [vmem:[%s1 + $0x238] sm:$0xff]
    %v137 = vld [vmem:[%s1 + $0x240] sm:$0xff]
    %v138 = vld [vmem:[%s1 + $0x248] sm:$0xff]
    %v139 = vld [vmem:[%s1 + $0x250] sm:$0xff]
    %v140 = vld [vmem:[%s1 + $0x258] sm:$0xff]
    %v141 = vld [vmem:[%s1 + $0x260] sm:$0xff]
    %v142 = vld [vmem:[%s1 + $0x268] sm:$0xff]
    %v143 = vld [vmem:[%s1 + $0x270] sm:$0xff]
    %v144 = vld [vmem:[%s1 + $0x278] sm:$0xff]
    %v145 = vld [vmem:[%s1 + $0x280] sm:$0xff]
    %v146 = vld [vmem:[%s1 + $0x288] sm:$0xff]
    %v147 = vld [vmem:[%s1 + $0x290] sm:$0xff]
    %v148 = vld [vmem:[%s1 + $0x298] sm:$0xff]
    %v149 = vld [vmem:[%s1 + $0x2a0] sm:$0xff]
    %v150 = vld [vmem:[%s1 + $0x2a8] sm:$0xff]
    %v151 = vld [vmem:[%s1 + $0x2b0] sm:$0xff]
    %v152 = vld [vmem:[%s1 + $0x2b8] sm:$0xff]
    %v153 = vld [vmem:[%s1 + $0x2c0] sm:$0xff]
    %v154 = vld [vmem:[%s1 + $0x2c8] sm:$0xff]
    %v155 = vld [vmem:[%s1 + $0x2d0] sm:$0xff]
    %v156 = vld [vmem:[%s1 + $0x2d8] sm:$0xff]
    %v157 = vld [vmem:[%s1 + $0x2e0] sm:$0xff]
    %v158 = vld [vmem:[%s1 + $0x2e8] sm:$0xff]
    %v159 = vld [vmem:[%s1 + $0x2f0] sm:$0xff]
    %v160 = vld [vmem:[%s1 + $0x2f8] sm:$0xff]
    %v161 = vld [vmem:[%s1 + $0x300] sm:$0xff]
    %v162 = vld [vmem:[%s1 + $0x308] sm:$0xff]
    %v163 = vld [vmem:[%s1 + $0x310] sm:$0xff]
    %v164 = vld [vmem:[%s1 + $0x318] sm:$0xff]
    %v165 = vld [vmem:[%s1 + $0x320] sm:$0xff]
    %v166 = vld [vmem:[%s1 + $0x328] sm:$0xff]
    %v167 = vld [vmem:[%s1 + $0x330] sm:$0xff]
    %v168 = vld [vmem:[%s1 + $0x338] sm:$0xff]
    %v169 = vld [vmem:[%s1 + $0x340] sm:$0xff]
    %v170 = vld [vmem:[%s1 + $0x348] sm:$0xff]
    %v171 = vld [vmem:[%s1 + $0x350] sm:$0xff]
    %v172 = vld [vmem:[%s1 + $0x358] sm:$0xff]
    %v173 = vld [vmem:[%s1 + $0x360] sm:$0xff]
    %v174 = vld [vmem:[%s1 + $0x368] sm:$0xff]
    %v175 = vld [vmem:[%s1 + $0x370] sm:$0xff]
    %v176 = vld [vmem:[%s1 + $0x378] sm:$0xff]
    %v177 = vld [vmem:[%s1 + $0x380] sm:$0xff]
    %v178 = vld [vmem:[%s1 + $0x388] sm:$0xff]
    %v179 = vld [vmem:[%s1 + $0x390] sm:$0xff]
    %v180 = vld [vmem:[%s1 + $0x398] sm:$0xff]
    %v181 = vld [vmem:[%s1 + $0x3a0] sm:$0xff]
    %v182 = vld [vmem:[%s1 + $0x3a8] sm:$0xff]
    %v183 = vld [vmem:[%s1 + $0x3b0] sm:$0xff]
    %v184 = vld [vmem:[%s1 + $0x3b8] sm:$0xff]
    %v185 = vld [vmem:[%s1 + $0x3c0] sm:$0xff]
    %v186 = vld [vmem:[%s1 + $0x3c8] sm:$0xff]
    %v187 = vld [vmem:[%s1 + $0x3d0] sm:$0xff]
    %v188 = vld [vmem:[%s1 + $0x3d8] sm:$0xff]
    %v189 = vld [vmem:[%s1 + $0x3e0] sm:$0xff]
    %v190 = vld [vmem:[%s1 + $0x3e8] sm:$0xff]
    %v191 = vld [vmem:[%s1 + $0x3f0] sm:$0xff]
    %v192 = vld [vmem:[%s1 + $0x3f8] sm:$0xff]
    %v193 = vld [vmem:[%s2] sm:$0x3]
    %v322 = vunpack.c.l.b16 %v65
    %v323 = vunpack.c.h.b16 %v65
    %v324 = vunpack.c.l.b16 %v66
    %v325 = vunpack.c.h.b16 %v66
    %v326 = vunpack.c.l.b16 %v67
    %v327 = vunpack.c.h.b16 %v67
    %v328 = vunpack.c.l.b16 %v68
    %v329 = vunpack.c.h.b16 %v68
    %v330 = vunpack.c.l.b16 %v69
    %v331 = vunpack.c.h.b16 %v69
    %v332 = vunpack.c.l.b16 %v70
    %v333 = vunpack.c.h.b16 %v70
    %v334 = vunpack.c.l.b16 %v71
    %v335 = vunpack.c.h.b16 %v71
    %v336 = vunpack.c.l.b16 %v72
    %v337 = vunpack.c.h.b16 %v72
    %v338 = vunpack.c.l.b16 %v73
    %v339 = vunpack.c.h.b16 %v73
    %v340 = vunpack.c.l.b16 %v74
    %v341 = vunpack.c.h.b16 %v74
    %v342 = vunpack.c.l.b16 %v75
    %v343 = vunpack.c.h.b16 %v75
    %v344 = vunpack.c.l.b16 %v76
    %v345 = vunpack.c.h.b16 %v76
    %v346 = vunpack.c.l.b16 %v77
    %v347 = vunpack.c.h.b16 %v77
    %v348 = vunpack.c.l.b16 %v78
    %v349 = vunpack.c.h.b16 %v78
    %v350 = vunpack.c.l.b16 %v79
    %v351 = vunpack.c.h.b16 %v79
    %v352 = vunpack.c.l.b16 %v80
    %v353 = vunpack.c.h.b16 %v80
    %v354 = vunpack.c.l.b16 %v81
    %v355 = vunpack.c.h.b16 %v81
    %v356 = vunpack.c.l.b16 %v82
    %v357 = vunpack.c.h.b16 %v82
    %v358 = vunpack.c.l.b16 %v83
    %v359 = vunpack.c.h.b16 %v83
    %v360 = vunpack.c.l.b16 %v84
    %v361 = vunpack.c.h.b16 %v84
    %v362 = vunpack.c.l.b16 %v85
    %v363 = vunpack.c.h.b16 %v85
    %v364 = vunpack.c.l.b16 %v86
    %v365 = vunpack.c.h.b16 %v86
    %v366 = vunpack.c.l.b16 %v87
    %v367 = vunpack.c.h.b16 %v87
    %v368 = vunpack.c.l.b16 %v88
    %v369 = vunpack.c.h.b16 %v88
    %v370 = vunpack.c.l.b16 %v89
    %v371 = vunpack.c.h.b16 %v89
    %v372 = vunpack.c.l.b16 %v90
    %v373 = vunpack.c.h.b16 %v90
    %v374 = vunpack.c.l.b16 %v91
    %v375 = vunpack.c.h.b16 %v91
    %v376 = vunpack.c.l.b16 %v92
    %v377 = vunpack.c.h.b16 %v92
    %v378 = vunpack.c.l.b16 %v93
    %v379 = vunpack.c.h.b16 %v93
    %v380 = vunpack.c.l.b16 %v94
    %v381 = vunpack.c.h.b16 %v94
    %v382 = vunpack.c.l.b16 %v95
    %v383 = vunpack.c.h.b16 %v95
    %v384 = vunpack.c.l.b16 %v96
    %v385 = vunpack.c.h.b16 %v96
    %v386 = vunpack.c.l.b16 %v97
    %v387 = vunpack.c.h.b16 %v97
    %v388 = vunpack.c.l.b16 %v98
    %v389 = vunpack.c.h.b16 %v98
    %v390 = vunpack.c.l.b16 %v99
    %v391 = vunpack.c.h.b16 %v99
    %v392 = vunpack.c.l.b16 %v100
    %v393 = vunpack.c.h.b16 %v100
    %v394 = vunpack.c.l.b16 %v101
    %v395 = vunpack.c.h.b16 %v101
    %v396 = vunpack.c.l.b16 %v102
    %v397 = vunpack.c.h.b16 %v102
    %v398 = vunpack.c.l.b16 %v103
    %v399 = vunpack.c.h.b16 %v103
    %v400 = vunpack.c.l.b16 %v104
    %v401 = vunpack.c.h.b16 %v104
    %v402 = vunpack.c.l.b16 %v105
    %v403 = vunpack.c.h.b16 %v105
    %v404 = vunpack.c.l.b16 %v106
    %v405 = vunpack.c.h.b16 %v106
    %v406 = vunpack.c.l.b16 %v107
    %v407 = vunpack.c.h.b16 %v107
    %v408 = vunpack.c.l.b16 %v108
    %v409 = vunpack.c.h.b16 %v108
    %v410 = vunpack.c.l.b16 %v109
    %v411 = vunpack.c.h.b16 %v109
    %v412 = vunpack.c.l.b16 %v110
    %v413 = vunpack.c.h.b16 %v110
    %v414 = vunpack.c.l.b16 %v111
    %v415 = vunpack.c.h.b16 %v111
    %v416 = vunpack.c.l.b16 %v112
    %v417 = vunpack.c.h.b16 %v112
    %v418 = vunpack.c.l.b16 %v113
    %v419 = vunpack.c.h.b16 %v113
    %v420 = vunpack.c.l.b16 %v114
    %v421 = vunpack.c.h.b16 %v114
    %v422 = vunpack.c.l.b16 %v115
    %v423 = vunpack.c.h.b16 %v115
    %v424 = vunpack.c.l.b16 %v116
    %v425 = vunpack.c.h.b16 %v116
    %v426 = vunpack.c.l.b16 %v117
    %v427 = vunpack.c.h.b16 %v117
    %v428 = vunpack.c.l.b16 %v118
    %v429 = vunpack.c.h.b16 %v118
    %v430 = vunpack.c.l.b16 %v119
    %v431 = vunpack.c.h.b16 %v119
    %v432 = vunpack.c.l.b16 %v120
    %v433 = vunpack.c.h.b16 %v120
    %v434 = vunpack.c.l.b16 %v121
    %v435 = vunpack.c.h.b16 %v121
    %v436 = vunpack.c.l.b16 %v122
    %v437 = vunpack.c.h.b16 %v122
    %v438 = vunpack.c.l.b16 %v123
    %v439 = vunpack.c.h.b16 %v123
    %v440 = vunpack.c.l.b16 %v124
    %v441 = vunpack.c.h.b16 %v124
    %v442 = vunpack.c.l.b16 %v125
    %v443 = vunpack.c.h.b16 %v125
    %v444 = vunpack.c.l.b16 %v126
    %v445 = vunpack.c.h.b16 %v126
    %v446 = vunpack.c.l.b16 %v127
    %v447 = vunpack.c.h.b16 %v127
    %v448 = vunpack.c.l.b16 %v128
    %v449 = vunpack.c.h.b16 %v128
    %v450 = vunpack.c.l.b16 %v129
    %v451 = vunpack.c.h.b16 %v129
    %v452 = vunpack.c.l.b16 %v130
    %v453 = vunpack.c.h.b16 %v130
    %v454 = vunpack.c.l.b16 %v131
    %v455 = vunpack.c.h.b16 %v131
    %v456 = vunpack.c.l.b16 %v132
    %v457 = vunpack.c.h.b16 %v132
    %v458 = vunpack.c.l.b16 %v133
    %v459 = vunpack.c.h.b16 %v133
    %v460 = vunpack.c.l.b16 %v134
    %v461 = vunpack.c.h.b16 %v134
    %v462 = vunpack.c.l.b16 %v135
    %v463 = vunpack.c.h.b16 %v135
    %v464 = vunpack.c.l.b16 %v136
    %v465 = vunpack.c.h.b16 %v136
    %v466 = vunpack.c.l.b16 %v137
    %v467 = vunpack.c.h.b16 %v137
    %v468 = vunpack.c.l.b16 %v138
    %v469 = vunpack.c.h.b16 %v138
    %v470 = vunpack.c.l.b16 %v139
    %v471 = vunpack.c.h.b16 %v139
    %v472 = vunpack.c.l.b16 %v140
    %v473 = vunpack.c.h.b16 %v140
    %v474 = vunpack.c.l.b16 %v141
    %v475 = vunpack.c.h.b16 %v141
    %v476 = vunpack.c.l.b16 %v142
    %v477 = vunpack.c.h.b16 %v142
    %v478 = vunpack.c.l.b16 %v143
    %v479 = vunpack.c.h.b16 %v143
    %v480 = vunpack.c.l.b16 %v144
    %v481 = vunpack.c.h.b16 %v144
    %v482 = vunpack.c.l.b16 %v145
    %v483 = vunpack.c.h.b16 %v145
    %v484 = vunpack.c.l.b16 %v146
    %v485 = vunpack.c.h.b16 %v146
    %v486 = vunpack.c.l.b16 %v147
    %v487 = vunpack.c.h.b16 %v147
    %v488 = vunpack.c.l.b16 %v148
    %v489 = vunpack.c.h.b16 %v148
    %v490 = vunpack.c.l.b16 %v149
    %v491 = vunpack.c.h.b16 %v149
    %v492 = vunpack.c.l.b16 %v150
    %v493 = vunpack.c.h.b16 %v150
    %v494 = vunpack.c.l.b16 %v151
    %v495 = vunpack.c.h.b16 %v151
    %v496 = vunpack.c.l.b16 %v152
    %v497 = vunpack.c.h.b16 %v152
    %v498 = vunpack.c.l.b16 %v153
    %v499 = vunpack.c.h.b16 %v153
    %v500 = vunpack.c.l.b16 %v154
    %v501 = vunpack.c.h.b16 %v154
    %v502 = vunpack.c.l.b16 %v155
    %v503 = vunpack.c.h.b16 %v155
    %v504 = vunpack.c.l.b16 %v156
    %v505 = vunpack.c.h.b16 %v156
    %v506 = vunpack.c.l.b16 %v157
    %v507 = vunpack.c.h.b16 %v157
    %v508 = vunpack.c.l.b16 %v158
    %v509 = vunpack.c.h.b16 %v158
    %v510 = vunpack.c.l.b16 %v159
    %v511 = vunpack.c.h.b16 %v159
    %v512 = vunpack.c.l.b16 %v160
    %v513 = vunpack.c.h.b16 %v160
    %v514 = vunpack.c.l.b16 %v161
    %v515 = vunpack.c.h.b16 %v161
    %v516 = vunpack.c.l.b16 %v162
    %v517 = vunpack.c.h.b16 %v162
    %v518 = vunpack.c.l.b16 %v163
    %v519 = vunpack.c.h.b16 %v163
    %v520 = vunpack.c.l.b16 %v164
    %v521 = vunpack.c.h.b16 %v164
    %v522 = vunpack.c.l.b16 %v165
    %v523 = vunpack.c.h.b16 %v165
    %v524 = vunpack.c.l.b16 %v166
    %v525 = vunpack.c.h.b16 %v166
    %v526 = vunpack.c.l.b16 %v167
    %v527 = vunpack.c.h.b16 %v167
    %v528 = vunpack.c.l.b16 %v168
    %v529 = vunpack.c.h.b16 %v168
    %v530 = vunpack.c.l.b16 %v169
    %v531 = vunpack.c.h.b16 %v169
    %v532 = vunpack.c.l.b16 %v170
    %v533 = vunpack.c.h.b16 %v170
    %v534 = vunpack.c.l.b16 %v171
    %v535 = vunpack.c.h.b16 %v171
    %v536 = vunpack.c.l.b16 %v172
    %v537 = vunpack.c.h.b16 %v172
    %v538 = vunpack.c.l.b16 %v173
    %v539 = vunpack.c.h.b16 %v173
    %v540 = vunpack.c.l.b16 %v174
    %v541 = vunpack.c.h.b16 %v174
    %v542 = vunpack.c.l.b16 %v175
    %v543 = vunpack.c.h.b16 %v175
    %v544 = vunpack.c.l.b16 %v176
    %v545 = vunpack.c.h.b16 %v176
    %v546 = vunpack.c.l.b16 %v177
    %v547 = vunpack.c.h.b16 %v177
    %v548 = vunpack.c.l.b16 %v178
    %v549 = vunpack.c.h.b16 %v178
    %v550 = vunpack.c.l.b16 %v179
    %v551 = vunpack.c.h.b16 %v179
    %v552 = vunpack.c.l.b16 %v180
    %v553 = vunpack.c.h.b16 %v180
    %v554 = vunpack.c.l.b16 %v181
    %v555 = vunpack.c.h.b16 %v181
    %v556 = vunpack.c.l.b16 %v182
    %v557 = vunpack.c.h.b16 %v182
    %v558 = vunpack.c.l.b16 %v183
    %v559 = vunpack.c.h.b16 %v183
    %v560 = vunpack.c.l.b16 %v184
    %v561 = vunpack.c.h.b16 %v184
    %v562 = vunpack.c.l.b16 %v185
    %v563 = vunpack.c.h.b16 %v185
    %v564 = vunpack.c.l.b16 %v186
    %v565 = vunpack.c.h.b16 %v186
    %v566 = vunpack.c.l.b16 %v187
    %v567 = vunpack.c.h.b16 %v187
    %v568 = vunpack.c.l.b16 %v188
    %v569 = vunpack.c.h.b16 %v188
    %v570 = vunpack.c.l.b16 %v189
    %v571 = vunpack.c.h.b16 %v189
    %v572 = vunpack.c.l.b16 %v190
    %v573 = vunpack.c.h.b16 %v190
    %v574 = vunpack.c.l.b16 %v191
    %v575 = vunpack.c.h.b16 %v191
    %v576 = vunpack.c.l.b16 %v192
    %v577 = vunpack.c.h.b16 %v192
    %v578 = vpack.c.b16 %v324, %v322
    %v579 = vpack.c.b16 %v325, %v323
    %v580 = vpack.c.b16 %v328, %v326
    %v581 = vpack.c.b16 %v329, %v327
    %v582 = vpack.c.b16 %v332, %v330
    %v583 = vpack.c.b16 %v333, %v331
    %v584 = vpack.c.b16 %v336, %v334
    %v585 = vpack.c.b16 %v337, %v335
    %v586 = vpack.c.b16 %v340, %v338
    %v587 = vpack.c.b16 %v341, %v339
    %v588 = vpack.c.b16 %v344, %v342
    %v589 = vpack.c.b16 %v345, %v343
    %v590 = vpack.c.b16 %v348, %v346
    %v591 = vpack.c.b16 %v349, %v347
    %v592 = vpack.c.b16 %v352, %v350
    %v593 = vpack.c.b16 %v353, %v351
    %v594 = vpack.c.b16 %v356, %v354
    %v595 = vpack.c.b16 %v357, %v355
    %v596 = vpack.c.b16 %v360, %v358
    %v597 = vpack.c.b16 %v361, %v359
    %v598 = vpack.c.b16 %v364, %v362
    %v599 = vpack.c.b16 %v365, %v363
    %v600 = vpack.c.b16 %v368, %v366
    %v601 = vpack.c.b16 %v369, %v367
    %v602 = vpack.c.b16 %v372, %v370
    %v603 = vpack.c.b16 %v373, %v371
    %v604 = vpack.c.b16 %v376, %v374
    %v605 = vpack.c.b16 %v377, %v375
    %v606 = vpack.c.b16 %v380, %v378
    %v607 = vpack.c.b16 %v381, %v379
    %v608 = vpack.c.b16 %v384, %v382
    %v609 = vpack.c.b16 %v385, %v383
    %v610 = vpack.c.b16 %v388, %v386
    %v611 = vpack.c.b16 %v389, %v387
    %v612 = vpack.c.b16 %v392, %v390
    %v613 = vpack.c.b16 %v393, %v391
    %v614 = vpack.c.b16 %v396, %v394
    %v615 = vpack.c.b16 %v397, %v395
    %v616 = vpack.c.b16 %v400, %v398
    %v617 = vpack.c.b16 %v401, %v399
    %v618 = vpack.c.b16 %v404, %v402
    %v619 = vpack.c.b16 %v405, %v403
    %v620 = vpack.c.b16 %v408, %v406
    %v621 = vpack.c.b16 %v409, %v407
    %v622 = vpack.c.b16 %v412, %v410
    %v623 = vpack.c.b16 %v413, %v411
    %v624 = vpack.c.b16 %v416, %v414
    %v625 = vpack.c.b16 %v417, %v415
    %v626 = vpack.c.b16 %v420, %v418
    %v627 = vpack.c.b16 %v421, %v419
    %v628 = vpack.c.b16 %v424, %v422
    %v629 = vpack.c.b16 %v425, %v423
    %v630 = vpack.c.b16 %v428, %v426
    %v631 = vpack.c.b16 %v429, %v427
    %v632 = vpack.c.b16 %v432, %v430
    %v633 = vpack.c.b16 %v433, %v431
    %v634 = vpack.c.b16 %v436, %v434
    %v635 = vpack.c.b16 %v437, %v435
    %v636 = vpack.c.b16 %v440, %v438
    %v637 = vpack.c.b16 %v441, %v439
    %v638 = vpack.c.b16 %v444, %v442
    %v639 = vpack.c.b16 %v445, %v443
    %v640 = vpack.c.b16 %v448, %v446
    %v641 = vpack.c.b16 %v449, %v447
    %v642 = vpack.c.b16 %v452, %v450
    %v643 = vpack.c.b16 %v453, %v451
    %v644 = vpack.c.b16 %v456, %v454
    %v645 = vpack.c.b16 %v457, %v455
    %v646 = vpack.c.b16 %v460, %v458
    %v647 = vpack.c.b16 %v461, %v459
    %v648 = vpack.c.b16 %v464, %v462
    %v649 = vpack.c.b16 %v465, %v463
    %v650 = vpack.c.b16 %v468, %v466
    %v651 = vpack.c.b16 %v469, %v467
    %v652 = vpack.c.b16 %v472, %v470
    %v653 = vpack.c.b16 %v473, %v471
    %v654 = vpack.c.b16 %v476, %v474
    %v655 = vpack.c.b16 %v477, %v475
    %v656 = vpack.c.b16 %v480, %v478
    %v657 = vpack.c.b16 %v481, %v479
    %v658 = vpack.c.b16 %v484, %v482
    %v659 = vpack.c.b16 %v485, %v483
    %v660 = vpack.c.b16 %v488, %v486
    %v661 = vpack.c.b16 %v489, %v487
    %v662 = vpack.c.b16 %v492, %v490
    %v663 = vpack.c.b16 %v493, %v491
    %v664 = vpack.c.b16 %v496, %v494
    %v665 = vpack.c.b16 %v497, %v495
    %v666 = vpack.c.b16 %v500, %v498
    %v667 = vpack.c.b16 %v501, %v499
    %v668 = vpack.c.b16 %v504, %v502
    %v669 = vpack.c.b16 %v505, %v503
    %v670 = vpack.c.b16 %v508, %v506
    %v671 = vpack.c.b16 %v509, %v507
    %v672 = vpack.c.b16 %v512, %v510
    %v673 = vpack.c.b16 %v513, %v511
    %v674 = vpack.c.b16 %v516, %v514
    %v675 = vpack.c.b16 %v517, %v515
    %v676 = vpack.c.b16 %v520, %v518
    %v677 = vpack.c.b16 %v521, %v519
    %v678 = vpack.c.b16 %v524, %v522
    %v679 = vpack.c.b16 %v525, %v523
    %v680 = vpack.c.b16 %v528, %v526
    %v681 = vpack.c.b16 %v529, %v527
    %v682 = vpack.c.b16 %v532, %v530
    %v683 = vpack.c.b16 %v533, %v531
    %v684 = vpack.c.b16 %v536, %v534
    %v685 = vpack.c.b16 %v537, %v535
    %v686 = vpack.c.b16 %v540, %v538
    %v687 = vpack.c.b16 %v541, %v539
    %v688 = vpack.c.b16 %v544, %v542
    %v689 = vpack.c.b16 %v545, %v543
    %v690 = vpack.c.b16 %v548, %v546
    %v691 = vpack.c.b16 %v549, %v547
    %v692 = vpack.c.b16 %v552, %v550
    %v693 = vpack.c.b16 %v553, %v551
    %v694 = vpack.c.b16 %v556, %v554
    %v695 = vpack.c.b16 %v557, %v555
    %v696 = vpack.c.b16 %v560, %v558
    %v697 = vpack.c.b16 %v561, %v559
    %v698 = vpack.c.b16 %v564, %v562
    %v699 = vpack.c.b16 %v565, %v563
    %v700 = vpack.c.b16 %v568, %v566
    %v701 = vpack.c.b16 %v569, %v567
    %v702 = vpack.c.b16 %v572, %v570
    %v703 = vpack.c.b16 %v573, %v571
    %v704 = vpack.c.b16 %v576, %v574
    %v705 = vpack.c.b16 %v577, %v575
    %v835 = vlaneseq
    %v836 = vshrl.u32 %v835, 7
    %v837 = vsub.s32 0, %v836
    %v838 = vrot.slane %v193, %v837
    %v839 = vlaneseq
    %v840 = vshrl.u32 %v839, 7
    %v841 = vsub.s32 1, %v840
    %v842 = vrot.slane %v193, %v841
    %845 = vmatprep.subr.bf16.mxu0 %v579
    %846 = vmatpush1.bf16.msra.mxu0 %v578
    %847 = vmatprep.subr.bf16.mxu0 %v581
    %848 = vmatpush1.bf16.msra.mxu0 %v580
    %849 = vmatprep.subr.bf16.mxu0 %v583
    %850 = vmatpush1.bf16.msra.mxu0 %v582
    %851 = vmatprep.subr.bf16.mxu0 %v585
    %852 = vmatpush1.bf16.msra.mxu0 %v584
    %853 = vmatprep.subr.bf16.mxu0 %v587
    %854 = vmatpush1.bf16.msra.mxu0 %v586
    %855 = vmatprep.subr.bf16.mxu0 %v589
    %856 = vmatpush1.bf16.msra.mxu0 %v588
    %857 = vmatprep.subr.bf16.mxu0 %v591
    %858 = vmatpush1.bf16.msra.mxu0 %v590
    %859 = vmatprep.subr.bf16.mxu0 %v593
    %860 = vmatpush1.bf16.msra.mxu0 %v592
    %861 = vmatprep.subr.bf16.mxu0 %v595
    %862 = vmatpush1.bf16.msra.mxu0 %v594
    %863 = vmatprep.subr.bf16.mxu0 %v597
    %864 = vmatpush1.bf16.msra.mxu0 %v596
    %865 = vmatprep.subr.bf16.mxu0 %v599
    %866 = vmatpush1.bf16.msra.mxu0 %v598
    %867 = vmatprep.subr.bf16.mxu0 %v601
    %868 = vmatpush1.bf16.msra.mxu0 %v600
    %869 = vmatprep.subr.bf16.mxu0 %v603
    %870 = vmatpush1.bf16.msra.mxu0 %v602
    %871 = vmatprep.subr.bf16.mxu0 %v605
    %872 = vmatpush1.bf16.msra.mxu0 %v604
    %873 = vmatprep.subr.bf16.mxu0 %v607
    %874 = vmatpush1.bf16.msra.mxu0 %v606
    %875 = vmatprep.subr.bf16.mxu0 %v609
    %876 = vmatpush1.bf16.msra.mxu0 %v608
    %877 = vmatprep.mubr.bf16.mxu0 %v58
    %878 = vmatmul.mubr.bf16.gmra.mrb[0].mxu0 %v57
    %v879 = vpop.f32.mrb[0].mxu0
    %v880 = vadd.f32 %v838, %v879
    %v881 = vpop.f32.mrb[0].mxu0
    %v882 = vadd.f32 %v842, %v881
    %v883 = vpop.f32.mrb[0].mxu0
    %v884 = vpop.f32.mrb[0].mxu0
    %885 = vdwg.mxu0
    %886 = vmatprep.subr.bf16.mxu0 %v611
    %887 = vmatpush1.bf16.msra.mxu0 %v610
    %888 = vmatprep.subr.bf16.mxu0 %v613
    %889 = vmatpush1.bf16.msra.mxu0 %v612
    %890 = vmatprep.subr.bf16.mxu0 %v615
    %891 = vmatpush1.bf16.msra.mxu0 %v614
    %892 = vmatprep.subr.bf16.mxu0 %v617
    %893 = vmatpush1.bf16.msra.mxu0 %v616
    %894 = vmatprep.subr.bf16.mxu0 %v619
    %895 = vmatpush1.bf16.msra.mxu0 %v618
    %896 = vmatprep.subr.bf16.mxu0 %v621
    %897 = vmatpush1.bf16.msra.mxu0 %v620
    %898 = vmatprep.subr.bf16.mxu0 %v623
    %899 = vmatpush1.bf16.msra.mxu0 %v622
    %900 = vmatprep.subr.bf16.mxu0 %v625
    %901 = vmatpush1.bf16.msra.mxu0 %v624
    %902 = vmatprep.subr.bf16.mxu0 %v627
    %903 = vmatpush1.bf16.msra.mxu0 %v626
    %904 = vmatprep.subr.bf16.mxu0 %v629
    %905 = vmatpush1.bf16.msra.mxu0 %v628
    %906 = vmatprep.subr.bf16.mxu0 %v631
    %907 = vmatpush1.bf16.msra.mxu0 %v630
    %908 = vmatprep.subr.bf16.mxu0 %v633
    %909 = vmatpush1.bf16.msra.mxu0 %v632
    %910 = vmatprep.subr.bf16.mxu0 %v635
    %911 = vmatpush1.bf16.msra.mxu0 %v634
    %912 = vmatprep.subr.bf16.mxu0 %v637
    %913 = vmatpush1.bf16.msra.mxu0 %v636
    %914 = vmatprep.subr.bf16.mxu0 %v639
    %915 = vmatpush1.bf16.msra.mxu0 %v638
    %916 = vmatprep.subr.bf16.mxu0 %v641
    %917 = vmatpush1.bf16.msra.mxu0 %v640
    %918 = vmatprep.mubr.bf16.mxu0 %v60
    %919 = vmatmul.mubr.bf16.gmra.mrb[0].mxu0 %v59
    %v920 = vpop.f32.mrb[0].mxu0
    %v921 = vadd.f32 %v880, %v920
    %v922 = vpop.f32.mrb[0].mxu0
    %v923 = vadd.f32 %v882, %v922
    %v924 = vpop.f32.mrb[0].mxu0
    %v925 = vpop.f32.mrb[0].mxu0
    %926 = vdwg.mxu0
    %927 = vmatprep.subr.bf16.mxu0 %v643
    %928 = vmatpush1.bf16.msra.mxu0 %v642
    %929 = vmatprep.subr.bf16.mxu0 %v645
    %930 = vmatpush1.bf16.msra.mxu0 %v644
    %931 = vmatprep.subr.bf16.mxu0 %v647
    %932 = vmatpush1.bf16.msra.mxu0 %v646
    %933 = vmatprep.subr.bf16.mxu0 %v649
    %934 = vmatpush1.bf16.msra.mxu0 %v648
    %935 = vmatprep.subr.bf16.mxu0 %v651
    %936 = vmatpush1.bf16.msra.mxu0 %v650
    %937 = vmatprep.subr.bf16.mxu0 %v653
    %938 = vmatpush1.bf16.msra.mxu0 %v652
    %939 = vmatprep.subr.bf16.mxu0 %v655
    %940 = vmatpush1.bf16.msra.mxu0 %v654
    %941 = vmatprep.subr.bf16.mxu0 %v657
    %942 = vmatpush1.bf16.msra.mxu0 %v656
    %943 = vmatprep.subr.bf16.mxu0 %v659
    %944 = vmatpush1.bf16.msra.mxu0 %v658
    %945 = vmatprep.subr.bf16.mxu0 %v661
    %946 = vmatpush1.bf16.msra.mxu0 %v660
    %947 = vmatprep.subr.bf16.mxu0 %v663
    %948 = vmatpush1.bf16.msra.mxu0 %v662
    %949 = vmatprep.subr.bf16.mxu0 %v665
    %950 = vmatpush1.bf16.msra.mxu0 %v664
    %951 = vmatprep.subr.bf16.mxu0 %v667
    %952 = vmatpush1.bf16.msra.mxu0 %v666
    %953 = vmatprep.subr.bf16.mxu0 %v669
    %954 = vmatpush1.bf16.msra.mxu0 %v668
    %955 = vmatprep.subr.bf16.mxu0 %v671
    %956 = vmatpush1.bf16.msra.mxu0 %v670
    %957 = vmatprep.subr.bf16.mxu0 %v673
    %958 = vmatpush1.bf16.msra.mxu0 %v672
    %959 = vmatprep.mubr.bf16.mxu0 %v62
    %960 = vmatmul.mubr.bf16.gmra.mrb[0].mxu0 %v61
    %v961 = vpop.f32.mrb[0].mxu0
    %v962 = vadd.f32 %v921, %v961
    %v963 = vpop.f32.mrb[0].mxu0
    %v964 = vadd.f32 %v923, %v963
    %v965 = vpop.f32.mrb[0].mxu0
    %v966 = vpop.f32.mrb[0].mxu0
    %967 = vdwg.mxu0
    %968 = vmatprep.subr.bf16.mxu0 %v675
    %969 = vmatpush1.bf16.msra.mxu0 %v674
    %970 = vmatprep.subr.bf16.mxu0 %v677
    %971 = vmatpush1.bf16.msra.mxu0 %v676
    %972 = vmatprep.subr.bf16.mxu0 %v679
    %973 = vmatpush1.bf16.msra.mxu0 %v678
    %974 = vmatprep.subr.bf16.mxu0 %v681
    %975 = vmatpush1.bf16.msra.mxu0 %v680
    %976 = vmatprep.subr.bf16.mxu0 %v683
    %977 = vmatpush1.bf16.msra.mxu0 %v682
    %978 = vmatprep.subr.bf16.mxu0 %v685
    %979 = vmatpush1.bf16.msra.mxu0 %v684
    %980 = vmatprep.subr.bf16.mxu0 %v687
    %981 = vmatpush1.bf16.msra.mxu0 %v686
    %982 = vmatprep.subr.bf16.mxu0 %v689
    %983 = vmatpush1.bf16.msra.mxu0 %v688
    %984 = vmatprep.subr.bf16.mxu0 %v691
    %985 = vmatpush1.bf16.msra.mxu0 %v690
    %986 = vmatprep.subr.bf16.mxu0 %v693
    %987 = vmatpush1.bf16.msra.mxu0 %v692
    %988 = vmatprep.subr.bf16.mxu0 %v695
    %989 = vmatpush1.bf16.msra.mxu0 %v694
    %990 = vmatprep.subr.bf16.mxu0 %v697
    %991 = vmatpush1.bf16.msra.mxu0 %v696
    %992 = vmatprep.subr.bf16.mxu0 %v699
    %993 = vmatpush1.bf16.msra.mxu0 %v698
    %994 = vmatprep.subr.bf16.mxu0 %v701
    %995 = vmatpush1.bf16.msra.mxu0 %v700
    %996 = vmatprep.subr.bf16.mxu0 %v703
    %997 = vmatpush1.bf16.msra.mxu0 %v702
    %998 = vmatprep.subr.bf16.mxu0 %v705
    %999 = vmatpush1.bf16.msra.mxu0 %v704
    %1000 = vmatprep.mubr.bf16.mxu0 %v64
    %1001 = vmatmul.mubr.bf16.gmra.mrb[0].mxu0 %v63
    %v1002 = vpop.f32.mrb[0].mxu0
    %v1003 = vadd.f32 %v962, %v1002
    %v1004 = vpop.f32.mrb[0].mxu0
    %v1005 = vadd.f32 %v964, %v1004
    %v1006 = vpop.f32.mrb[0].mxu0
    %v1007 = vpop.f32.mrb[0].mxu0
    %1008 = vdwg.mxu0
    %v1009 = vmax.f32 %v1003, 0.0
    %v1010 = vmax.f32 %v1005, 0.0
    %v1013 = vcombine.low %v1009, %v1010
    %v1015 = vunpack.c.l.s4 1966171168
    %v1016 = vunpack.c.0.s8 %v1015
    %v1017 = vlaneseq
    %v1018 = vshrl.u32 %v1017, 7
    %v1019 = vsub.s32 %v1016, %v1018
    %v1020 = vrot.slane %v1013, %v1019
    %v1022 = vunpack.c.l.s4 1966171168
    %v1023 = vunpack.c.0.s8 %v1022
    %v1024 = vlaneseq
    %v1025 = vshrl.u32 %v1024, 7
    %v1026 = vsub.s32 %v1023, %v1025
    %v1027 = vrot.slane %v1020, %v1026
    %v1029 = vlaneseq
    %vm1030 = vcmp.ge.s32.totalorder %v1029, 0
    %vm1031 = vcmp.lt.s32.totalorder %v1029, 240
    %vm1032 = vmand %vm1030, %vm1031
    %1033 = vst.msk [vmem:[#allocation2] sm:$0x3] %vm1032, %v1027
    // Predicated region
    $region14: #{conv2d_1x1_relu.1} parent=1 // pred_check
      _
    $region15: #{conv2d_1x1_relu.1} parent=1 // pred_check_branch
      %1035 = sbr.rel (0) target = $region17
    $region16: #{conv2d_1x1_relu.1} parent=1 // pred_region
      %s1037 = ssub.s32 32, 32
      %1038 = vsyncadd [#allocation3], %s1037
      %s1040 = sshll.u32 [#allocation2], 4
      %s1041 = int_to_ptr.vmem [resolvable:$true] %s1040
      %1043 = dma.vmem_to_hbm [thread:$0]  %s1041, 32, %s3, [#allocation3]
    $region17: #{conv2d_1x1_relu.1} parent=1 // pred_fallthru
      _
    // Predicated region
    $region18: #{conv2d_1x1_relu.1} parent=1 // pred_check
      _
    $region19: #{conv2d_1x1_relu.1} parent=1 // pred_check_branch
      %1045 = sbr.rel (0) target = $region21
    $region20: #{conv2d_1x1_relu.1} parent=1 // pred_region
      %1046 = dma.done [#allocation3], 32
    $region21: #{conv2d_1x1_relu.1} parent=1 // pred_fallthru
      _
    %1047 = vsyncpa [#allocation3], 1

</llo_original>
